<compile_context>
chip_gen: v7x
topology: tpu7x:2x2x1
jax: 0.10.0
libtpu: 0.0.40
codegen_flags: <defaults>
</compile_context>

<pallas_src>
import functools
import math

import jax
import jax.numpy as jnp
from jax import lax
from jax.experimental import pallas as pl
from jax.experimental.pallas import tpu as pltpu


# ----------------------------- tiling helper --------------------------------

def _pick_tile(dim, target, align):
    """Largest tile <= target that divides `dim` and is a multiple of `align`;
    falls back to the full dimension (a full-extent block is always legal)."""
    if dim <= target:
        return dim
    t = (target // align) * align
    while t >= align:
        if dim % t == 0:
            return t
        t -= align
    return dim


# ----------------------------- Pallas kernels -------------------------------

def _matmul_bias_kernel(x_ref, w_ref, b_ref, o_ref, acc_ref, *, activation):
    @pl.when(pl.program_id(2) == 0)
    def _():
        acc_ref[...] = jnp.zeros_like(acc_ref)

    acc_ref[...] += jnp.dot(x_ref[...], w_ref[...],
                            preferred_element_type=jnp.float32)

    @pl.when(pl.program_id(2) == pl.num_programs(2) - 1)
    def _():
        y = acc_ref[...] + b_ref[...]
        if activation == "relu":
            y = jnp.maximum(y, 0.0)
        o_ref[...] = y.astype(o_ref.dtype)


def linear(x, w, b, activation=None, tm=256, tn=512, tk=512):
    """x: (M, K), w: (K, N), b: (1, N) -> (M, N).  Tiled accumulator matmul."""
    M, K = x.shape
    N = w.shape[1]
    tm = _pick_tile(M, tm, 8)
    tn = _pick_tile(N, tn, 128)
    tk = _pick_tile(K, tk, 128)
    grid = (M // tm, N // tn, K // tk)
    return pl.pallas_call(
        functools.partial(_matmul_bias_kernel, activation=activation),
        out_shape=jax.ShapeDtypeStruct((M, N), jnp.float32),
        grid=grid,
        in_specs=[pl.BlockSpec((tm, tk), lambda i, j, k: (i, k)),
                  pl.BlockSpec((tk, tn), lambda i, j, k: (k, j)),
                  pl.BlockSpec((1, tn), lambda i, j, k: (0, j))],
        out_specs=pl.BlockSpec((tm, tn), lambda i, j, k: (i, j)),
        scratch_shapes=[pltpu.VMEM((tm, tn), jnp.float32)],
        compiler_params=pltpu.CompilerParams(
            dimension_semantics=("parallel", "parallel", "arbitrary")),
    )(x, w, b)


def _matmul_resid_ln_kernel(x_ref, w_ref, b_ref, r_ref, g_ref, be_ref,
                            o_ref, acc_ref, *, eps):
    @pl.when(pl.program_id(1) == 0)
    def _():
        acc_ref[...] = jnp.zeros_like(acc_ref)

    acc_ref[...] += jnp.dot(x_ref[...], w_ref[...],
                            preferred_element_type=jnp.float32)

    @pl.when(pl.program_id(1) == pl.num_programs(1) - 1)
    def _():
        y = acc_ref[...] + b_ref[...] + r_ref[...]
        mu = jnp.mean(y, axis=-1, keepdims=True)
        var = jnp.mean((y - mu) ** 2, axis=-1, keepdims=True)
        yn = (y - mu) * lax.rsqrt(var + eps)
        o_ref[...] = (yn * g_ref[...] + be_ref[...]).astype(o_ref.dtype)


def linear_resid_ln(x, w, b, residual, gamma, beta, eps=1e-6, tm=256, tk=512):
    """Matmul + bias + residual add + LayerNorm fused epilogue.
    Requires the full output feature dim N in one tile (N = d_model)."""
    M, K = x.shape
    N = w.shape[1]
    tm = _pick_tile(M, tm, 8)
    tk = _pick_tile(K, tk, 128)
    grid = (M // tm, K // tk)
    return pl.pallas_call(
        functools.partial(_matmul_resid_ln_kernel, eps=eps),
        out_shape=jax.ShapeDtypeStruct((M, N), jnp.float32),
        grid=grid,
        in_specs=[pl.BlockSpec((tm, tk), lambda i, k: (i, k)),
                  pl.BlockSpec((tk, N), lambda i, k: (k, 0)),
                  pl.BlockSpec((1, N), lambda i, k: (0, 0)),
                  pl.BlockSpec((tm, N), lambda i, k: (i, 0)),
                  pl.BlockSpec((1, N), lambda i, k: (0, 0)),
                  pl.BlockSpec((1, N), lambda i, k: (0, 0))],
        out_specs=pl.BlockSpec((tm, N), lambda i, k: (i, 0)),
        scratch_shapes=[pltpu.VMEM((tm, N), jnp.float32)],
        compiler_params=pltpu.CompilerParams(
            dimension_semantics=("parallel", "arbitrary")),
    )(x, w, b, residual, gamma, beta)


def _ffn_kernel(x_ref, w1_ref, b1_ref, w2_ref, b2_ref, g_ref, be_ref,
                o_ref, acc_ref, *, eps):
    @pl.when(pl.program_id(1) == 0)
    def _():
        acc_ref[...] = jnp.zeros_like(acc_ref)

    # hidden tile for this d_ff slice stays in VMEM/vregs (never hits HBM)
    h = jnp.dot(x_ref[...], w1_ref[...],
                preferred_element_type=jnp.float32) + b1_ref[...]
    h = jnp.maximum(h, 0.0)
    acc_ref[...] += jnp.dot(h, w2_ref[...], preferred_element_type=jnp.float32)

    @pl.when(pl.program_id(1) == pl.num_programs(1) - 1)
    def _():
        y = acc_ref[...] + b2_ref[...] + x_ref[...]          # residual = x
        mu = jnp.mean(y, axis=-1, keepdims=True)
        var = jnp.mean((y - mu) ** 2, axis=-1, keepdims=True)
        yn = (y - mu) * lax.rsqrt(var + eps)
        o_ref[...] = (yn * g_ref[...] + be_ref[...]).astype(o_ref.dtype)


def ffn_fused(x, w1, b1, w2, b2, gamma, beta, eps=1e-6, tm=256, tf=512):
    """Position-wise FFN: LN(x + relu(x@w1 + b1)@w2 + b2), one kernel."""
    M, D = x.shape
    F = w1.shape[1]
    tm = _pick_tile(M, tm, 8)
    tf = _pick_tile(F, tf, 128)
    grid = (M // tm, F // tf)
    return pl.pallas_call(
        functools.partial(_ffn_kernel, eps=eps),
        out_shape=jax.ShapeDtypeStruct((M, D), jnp.float32),
        grid=grid,
        in_specs=[pl.BlockSpec((tm, D), lambda i, j: (i, 0)),
                  pl.BlockSpec((D, tf), lambda i, j: (0, j)),
                  pl.BlockSpec((1, tf), lambda i, j: (0, j)),
                  pl.BlockSpec((tf, D), lambda i, j: (j, 0)),
                  pl.BlockSpec((1, D), lambda i, j: (0, 0)),
                  pl.BlockSpec((1, D), lambda i, j: (0, 0)),
                  pl.BlockSpec((1, D), lambda i, j: (0, 0))],
        out_specs=pl.BlockSpec((tm, D), lambda i, j: (i, 0)),
        scratch_shapes=[pltpu.VMEM((tm, D), jnp.float32)],
        compiler_params=pltpu.CompilerParams(
            dimension_semantics=("parallel", "arbitrary")),
    )(x, w1, b1, w2, b2, gamma, beta)


def _layernorm_kernel(x_ref, g_ref, b_ref, o_ref, *, eps):
    x = x_ref[...]
    mu = jnp.mean(x, axis=-1, keepdims=True)
    var = jnp.mean((x - mu) ** 2, axis=-1, keepdims=True)
    y = (x - mu) * lax.rsqrt(var + eps)
    o_ref[...] = (y * g_ref[...] + b_ref[...]).astype(o_ref.dtype)


def layernorm(x, gamma, beta, eps=1e-6, tm=512):
    """Row-tiled LayerNorm over the last dim."""
    M, D = x.shape
    tm = _pick_tile(M, tm, 8)
    grid = (M // tm,)
    return pl.pallas_call(
        functools.partial(_layernorm_kernel, eps=eps),
        out_shape=jax.ShapeDtypeStruct((M, D), jnp.float32),
        grid=grid,
        in_specs=[pl.BlockSpec((tm, D), lambda i: (i, 0)),
                  pl.BlockSpec((1, D), lambda i: (0, 0)),
                  pl.BlockSpec((1, D), lambda i: (0, 0))],
        out_specs=pl.BlockSpec((tm, D), lambda i: (i, 0)),
        compiler_params=pltpu.CompilerParams(dimension_semantics=("parallel",)),
    )(x, gamma, beta)


def _attention_kernel(q_ref, k_ref, v_ref, m_ref, o_ref, *, scale):
    q = q_ref[0] * scale          # (H, Lq, dk) — scale folded in before the dot
    k = k_ref[0]                  # (H, Lk, dk)
    v = v_ref[0]                  # (H, Lk, dv)
    m = m_ref[0, 0]               # (Lq, Lk)  1.0 = keep, 0.0 = masked
    s = jnp.einsum('hqd,hkd->hqk', q, k, preferred_element_type=jnp.float32)
    s = jnp.where(m[None, :, :] > 0.5, s, -1e9)     # masked_fill(mask == 0, -1e9)
    s = s - jnp.max(s, axis=-1, keepdims=True)
    p = jnp.exp(s)
    denom = jnp.sum(p, axis=-1, keepdims=True)
    p = p * pl.reciprocal(denom, approx=True)       # EUP slot, off the VPU path
    o_ref[0] = jnp.einsum('hqk,hkd->hqd', p, v, preferred_element_type=jnp.float32)


def scaled_dot_attention(q, k, v, mask, d_k):
    """q: (B,H,Lq,dk), k: (B,H,Lk,dk), v: (B,H,Lk,dv), mask: (B,1,Lq,Lk) f32."""
    B, H, Lq, dk = q.shape
    Lk = k.shape[2]
    dv = v.shape[3]
    return pl.pallas_call(
        functools.partial(_attention_kernel, scale=1.0 / math.sqrt(d_k)),
        out_shape=jax.ShapeDtypeStruct((B, H, Lq, dv), jnp.float32),
        grid=(B,),
        in_specs=[pl.BlockSpec((1, H, Lq, dk), lambda b: (b, 0, 0, 0)),
                  pl.BlockSpec((1, H, Lk, dk), lambda b: (b, 0, 0, 0)),
                  pl.BlockSpec((1, H, Lk, dv), lambda b: (b, 0, 0, 0)),
                  pl.BlockSpec((1, 1, Lq, Lk), lambda b: (b, 0, 0, 0))],
        out_specs=pl.BlockSpec((1, H, Lq, dv), lambda b: (b, 0, 0, 0)),
        compiler_params=pltpu.CompilerParams(dimension_semantics=("parallel",)),
    )(q, k, v, mask)


# ----------------------------- model glue -----------------------------------

def sinusoid_pos_table(n_position, d_model):
    pos = jnp.arange(n_position, dtype=jnp.float32)[:, None]
    i = jnp.arange(d_model, dtype=jnp.float32)[None, :]
    angle = pos / jnp.power(10000.0, 2.0 * jnp.floor(i / 2.0) / d_model)
    even = (jnp.arange(d_model) % 2 == 0)[None, :]
    return jnp.where(even, jnp.sin(angle), jnp.cos(angle))  # (n_position, d_model)


def multi_head_attention(p, q_in, kv_in, mask, n_head, d_k, d_v):
    B, Lq, D = q_in.shape
    Lk = kv_in.shape[1]
    H = n_head
    q_flat = q_in.reshape(B * Lq, D)
    kv_flat = kv_in.reshape(B * Lk, D)

    q = linear(q_flat, p["w_q"], p["b_q"])             # (B*Lq, H*dk)
    kv = linear(kv_flat, p["w_kv"], p["b_kv"])         # (B*Lk, H*dk + H*dv) fused K|V
    k = kv[:, : H * d_k]
    v = kv[:, H * d_k:]

    q = q.reshape(B, Lq, H, d_k).transpose(0, 2, 1, 3)  # (B, H, Lq, dk)
    k = k.reshape(B, Lk, H, d_k).transpose(0, 2, 1, 3)
    v = v.reshape(B, Lk, H, d_v).transpose(0, 2, 1, 3)

    m = jnp.broadcast_to(mask, (B, 1, Lq, Lk)).astype(jnp.float32)  # no per-head dup
    o = scaled_dot_attention(q, k, v, m, d_k)            # (B, H, Lq, dv)
    o = o.transpose(0, 2, 1, 3).reshape(B * Lq, H * d_v)

    # output projection + residual + LayerNorm fused in one kernel
    out = linear_resid_ln(o, p["w_o"], p["b_o"], q_flat, p["ln_g"], p["ln_b"])
    return out.reshape(B, Lq, D)


def pos_ffn(p, x):
    B, L, D = x.shape
    xf = x.reshape(B * L, D)
    y = ffn_fused(xf, p["w1"], p["b1"], p["w2"], p["b2"], p["ln_g"], p["ln_b"])
    return y.reshape(B, L, D)


def encoder_forward(p, src, src_mask, cfg):
    B, Ls = src.shape
    D = cfg["d_model"]
    x = jnp.take(p["emb"], src, axis=0)                 # embedding lookup (glue)
    x = x + p["pos_table"][None, :Ls, :]                # sinusoidal positional encoding
    x = layernorm(x.reshape(B * Ls, D), p["ln_g"], p["ln_b"]).reshape(B, Ls, D)
    for lp in p["layers"]:
        x = multi_head_attention(lp["slf"], x, x, src_mask,
                                 cfg["n_head"], cfg["d_k"], cfg["d_v"])
        x = pos_ffn(lp["ffn"], x)
    return x


def decoder_forward(p, trg, enc_out, trg_mask, src_mask, cfg):
    B, Lt = trg.shape
    D = cfg["d_model"]
    x = jnp.take(p["emb"], trg, axis=0)
    x = x + p["pos_table"][None, :Lt, :]
    x = layernorm(x.reshape(B * Lt, D), p["ln_g"], p["ln_b"]).reshape(B, Lt, D)
    for lp in p["layers"]:
        x = multi_head_attention(lp["slf"], x, x, trg_mask,
                                 cfg["n_head"], cfg["d_k"], cfg["d_v"])
        x = multi_head_attention(lp["enc"], x, enc_out, src_mask,
                                 cfg["n_head"], cfg["d_k"], cfg["d_v"])
        x = pos_ffn(lp["ffn"], x)
    logits = linear(x.reshape(B * Lt, D), p["w_out"], p["b_out"])
    return logits.reshape(B, Lt, -1)


def transformer_forward(params, src, trg, cfg):
    # make_src_mask: (src != pad).unsqueeze(1).unsqueeze(2) -> (B, 1, 1, Ls)
    src_mask = (src != cfg["src_pad_idx"])[:, None, None, :]
    # make_trg_mask: pad mask & lower-triangular causal mask -> (B, 1, Lt, Lt)
    Lt = trg.shape[1]
    trg_pad = (trg != cfg["trg_pad_idx"])[:, None, None, :]
    sub = jnp.tril(jnp.ones((Lt, Lt), dtype=bool))
    trg_mask = trg_pad & sub[None, None, :, :]
    enc_src = encoder_forward(params["encoder"], src, src_mask, cfg)
    return decoder_forward(params["decoder"], trg, enc_src, trg_mask, src_mask, cfg)


# ------------------------ deterministic param init --------------------------

def _dense(key, fan_in, fan_out):
    w = jax.random.normal(key, (fan_in, fan_out), jnp.float32) / math.sqrt(fan_in)
    b = jnp.zeros((1, fan_out), jnp.float32)
    return w, b


def _mha_params(keys, d_model, n_head, d_k, d_v):
    wq, bq = _dense(keys[0], d_model, n_head * d_k)
    wk, bk = _dense(keys[1], d_model, n_head * d_k)
    wv, bv = _dense(keys[2], d_model, n_head * d_v)
    wo, bo = _dense(keys[3], n_head * d_v, d_model)
    return dict(w_q=wq, b_q=bq,
                w_kv=jnp.concatenate([wk, wv], axis=1),     # fused K|V projection
                b_kv=jnp.concatenate([bk, bv], axis=1),
                w_o=wo, b_o=bo,
                ln_g=jnp.ones((1, d_model), jnp.float32),
                ln_b=jnp.zeros((1, d_model), jnp.float32))


def _ffn_params(keys, d_model, d_ff):
    w1, b1 = _dense(keys[0], d_model, d_ff)
    w2, b2 = _dense(keys[1], d_ff, d_model)
    return dict(w1=w1, b1=b1, w2=w2, b2=b2,
                ln_g=jnp.ones((1, d_model), jnp.float32),
                ln_b=jnp.zeros((1, d_model), jnp.float32))


def init_params(key, cfg):
    D, F = cfg["d_model"], cfg["d_ff"]
    H, dk, dv = cfg["n_head"], cfg["d_k"], cfg["d_v"]
    keys = iter(jax.random.split(key, 256))

    def nk(n):
        return [next(keys) for _ in range(n)]

    enc_layers = []
    for _ in range(cfg["num_layers"]):
        enc_layers.append(dict(slf=_mha_params(nk(4), D, H, dk, dv),
                               ffn=_ffn_params(nk(2), D, F)))
    dec_layers = []
    for _ in range(cfg["num_layers"]):
        dec_layers.append(dict(slf=_mha_params(nk(4), D, H, dk, dv),
                               enc=_mha_params(nk(4), D, H, dk, dv),
                               ffn=_ffn_params(nk(2), D, F)))
    pos_table = sinusoid_pos_table(cfg["n_position"], D)
    w_out, b_out = _dense(next(keys), D, cfg["output_dim"])
    encoder = dict(
        emb=jax.random.normal(next(keys), (cfg["input_dim"], D), jnp.float32) * 0.02,
        pos_table=pos_table,
        ln_g=jnp.ones((1, D), jnp.float32), ln_b=jnp.zeros((1, D), jnp.float32),
        layers=enc_layers)
    decoder = dict(
        emb=jax.random.normal(next(keys), (cfg["output_dim"], D), jnp.float32) * 0.02,
        pos_table=pos_table,
        ln_g=jnp.ones((1, D), jnp.float32), ln_b=jnp.zeros((1, D), jnp.float32),
        layers=dec_layers,
        w_out=w_out, b_out=b_out)
    return dict(encoder=encoder, decoder=decoder)


# --------------------------------- main --------------------------------------

if __name__ == "__main__":
    cfg = dict(
        input_dim=32, output_dim=32,
        src_pad_idx=0, trg_pad_idx=0,
        d_model=32, d_ff=64,
        num_layers=2, n_head=4, d_k=8, d_v=8,
        n_position=16,
    )
    key = jax.random.PRNGKey(0)
    pk, sk, tk = jax.random.split(key, 3)
    params = init_params(pk, cfg)

    B, Ls, Lt = 2, 8, 8
    # token ids in [1, vocab) so no pad positions (mask logic still exercised)
    src = jax.random.randint(sk, (B, Ls), 1, cfg["input_dim"], dtype=jnp.int32)
    trg = jax.random.randint(tk, (B, Lt), 1, cfg["output_dim"], dtype=jnp.int32)

    out = transformer_forward(params, src, trg, cfg)
    out = jax.block_until_ready(out)
    assert out.shape == (B, Lt, cfg["output_dim"])
    assert bool(jnp.all(jnp.isfinite(out)))
    print("KERNEL_OK")
</pallas_src>

<mosaic_0001>
module attributes {stable_mosaic.version = 11 : i64} {
  func.func @_layernorm_kernel(%arg0: i32, %arg1: memref<16x32xf32, #tpu.memory_space<vmem>>, %arg2: memref<1x32xf32, #tpu.memory_space<vmem>>, %arg3: memref<1x32xf32, #tpu.memory_space<vmem>>, %arg4: memref<16x32xf32, #tpu.memory_space<vmem>>) attributes {dimension_semantics = [#tpu.dimension_semantics<parallel>], iteration_bounds = array<i64: 1>, scalar_prefetch = 0 : i64, scratch_operands = 0 : i64, tpu.core_type = #tpu.core_type<tc>, window_params = [{transform_indices = @transform_0, window_bounds = array<i64: 16, 32>}, {pipeline_mode = #tpu.pipeline_mode<synchronous>, transform_indices = @transform_1, window_bounds = array<i64: 1, 32>}, {pipeline_mode = #tpu.pipeline_mode<synchronous>, transform_indices = @transform_2, window_bounds = array<i64: 1, 32>}, {transform_indices = @transform_3, window_bounds = array<i64: 16, 32>}]} {
    %c0 = arith.constant 0 : index
    %c0_0 = arith.constant 0 : index
    %0 = vector.load %arg1[%c0, %c0_0] : memref<16x32xf32, #tpu.memory_space<vmem>>, vector<16x32xf32>
    %cst = arith.constant dense<0.000000e+00> : vector<16xf32>
    %1 = vector.multi_reduction <add>, %0, %cst [1] : vector<16x32xf32> to vector<16xf32>
    %2 = vector.shape_cast %1 : vector<16xf32> to vector<16x1xf32>
    %cst_1 = arith.constant 3.200000e+01 : f32
    %3 = vector.broadcast %cst_1 : f32 to vector<16x1xf32>
    %4 = arith.divf %2, %3 : vector<16x1xf32>
    %5 = vector.broadcast %4 : vector<16x1xf32> to vector<16x32xf32>
    %6 = arith.subf %0, %5 : vector<16x32xf32>
    %7 = arith.mulf %6, %6 : vector<16x32xf32>
    %cst_2 = arith.constant dense<0.000000e+00> : vector<16xf32>
    %8 = vector.multi_reduction <add>, %7, %cst_2 [1] : vector<16x32xf32> to vector<16xf32>
    %9 = vector.shape_cast %8 : vector<16xf32> to vector<16x1xf32>
    %cst_3 = arith.constant 3.200000e+01 : f32
    %10 = vector.broadcast %cst_3 : f32 to vector<16x1xf32>
    %11 = arith.divf %9, %10 : vector<16x1xf32>
    %12 = vector.broadcast %4 : vector<16x1xf32> to vector<16x32xf32>
    %13 = arith.subf %0, %12 : vector<16x32xf32>
    %cst_4 = arith.constant 9.99999997E-7 : f32
    %14 = vector.broadcast %cst_4 : f32 to vector<16x1xf32>
    %15 = arith.addf %11, %14 : vector<16x1xf32>
    %16 = math.rsqrt %15 : vector<16x1xf32>
    %17 = vector.broadcast %16 : vector<16x1xf32> to vector<16x32xf32>
    %18 = arith.mulf %13, %17 : vector<16x32xf32>
    %c0_5 = arith.constant 0 : index
    %c0_6 = arith.constant 0 : index
    %19 = vector.load %arg2[%c0_5, %c0_6] : memref<1x32xf32, #tpu.memory_space<vmem>>, vector<1x32xf32>
    %20 = vector.broadcast %19 : vector<1x32xf32> to vector<16x32xf32>
    %21 = arith.mulf %18, %20 : vector<16x32xf32>
    %c0_7 = arith.constant 0 : index
    %c0_8 = arith.constant 0 : index
    %22 = vector.load %arg3[%c0_7, %c0_8] : memref<1x32xf32, #tpu.memory_space<vmem>>, vector<1x32xf32>
    %23 = vector.broadcast %22 : vector<1x32xf32> to vector<16x32xf32>
    %24 = arith.addf %21, %23 : vector<16x32xf32>
    %c0_9 = arith.constant 0 : index
    %c0_10 = arith.constant 0 : index
    %25 = vector.load %arg4[%c0_9, %c0_10] : memref<16x32xf32, #tpu.memory_space<vmem>>, vector<16x32xf32>
    tpu.vector_store %arg4[%c0_9, %c0_10], %24 {strides = array<i32>} : memref<16x32xf32, #tpu.memory_space<vmem>>, vector<16x32xf32>,
    return
  }
  func.func @transform_0(%arg0: i32) -> (i32, i32) {
    %c0_i32 = arith.constant 0 : i32
    %c0_i32_0 = arith.constant 0 : i32
    return %arg0, %c0_i32 : i32, i32
  }
  func.func @transform_1(%arg0: i32) -> (i32, i32) {
    %c0_i32 = arith.constant 0 : i32
    %c0_i32_0 = arith.constant 0 : i32
    %c0_i32_1 = arith.constant 0 : i32
    return %c0_i32, %c0_i32_0 : i32, i32
  }
  func.func @transform_2(%arg0: i32) -> (i32, i32) {
    %c0_i32 = arith.constant 0 : i32
    %c0_i32_0 = arith.constant 0 : i32
    %c0_i32_1 = arith.constant 0 : i32
    return %c0_i32, %c0_i32_0 : i32, i32
  }
  func.func @transform_3(%arg0: i32) -> (i32, i32) {
    %c0_i32 = arith.constant 0 : i32
    %c0_i32_0 = arith.constant 0 : i32
    return %arg0, %c0_i32 : i32, i32
  }
}

</mosaic_0001>

<llo_original>
// kernel: tpu_custom_call.1
$region0: #{tpu_custom_call.1}
  #allocation0 [shape = 'u32[]', space=smem, size = 0x4, offset = 0x4, fixed_abs, tag = 'smem constant byte address 0x4 - core index']
  #allocation1 [shape = 'u32[144,128]{1,0:T(1,128)}', space=vmem, size = 0x12000, scoped, tag = 'internal scratch']
  %s0 = inlined_call_operand.hbm [shape: f32[16,32], index: 0, kind: input, shape index: {}]
  %s1 = inlined_call_operand.vmem [shape: f32[1,32], index: 1, kind: input, shape index: {}]
  %s2 = inlined_call_operand.vmem [shape: f32[1,32], index: 2, kind: input, shape index: {}]
  %s3 = inlined_call_operand.hbm [shape: f32[16,32], index: 3, kind: output, shape index: {}]
  %s4 = sld [smem:[#allocation0]]
  $region26: #{tpu_custom_call.1} parent=0
    _
  %s6 = ssub.s32 1, %s4
  %s7 = scalar_select 0, %s6, %s4
  $region1: #{tpu_custom_call.1} parent=0
    #allocation2 [shape = 'u8[8192]{0}', space=vmem, size = 0x2000, scoped, tag = 'input window, operand 0, single buffered']
    #allocation3 [shape = 's32[1]{0}', space=sflag, size = 0x4, scoped, tag = 'scoped memory for tpu_custom_call.1']
    #allocation4 [shape = 's32[1]{0}', space=sflag, size = 0x4, scoped, tag = 'scoped memory for tpu_custom_call.1']
    #allocation5 [shape = 'u8[8192]{0}', space=vmem, size = 0x2000, scoped, tag = 'output window, operand 0, single buffered']
    %8 = vsyncpa [#allocation3], 0
    %9 = vsyncpa [#allocation4], 0
    // Predicated region
    $region2: #{tpu_custom_call.1} parent=1 // pred_check
      _
    $region3: #{tpu_custom_call.1} parent=1 // pred_check_branch
      %11 = sbr.rel (0) target = $region5
    $region4: #{tpu_custom_call.1} parent=1 // pred_region
      %s13 = ssub.s32 256, 256
      %14 = vsyncadd [#allocation3], %s13
      %s15 = sshll.u32 [#allocation2], 4
      %s16 = int_to_ptr.vmem [resolvable:$true] %s15
      %21 = dma.hbm_to_vmem [thread:$0]  %s0, 256, %s16, [#allocation3], 128, 128, 8
    $region5: #{tpu_custom_call.1} parent=1 // pred_fallthru
      _
    // Predicated region
    $region6: #{tpu_custom_call.1} parent=1 // pred_check
      _
    $region7: #{tpu_custom_call.1} parent=1 // pred_check_branch
      %23 = sbr.rel (0) target = $region9
    $region8: #{tpu_custom_call.1} parent=1 // pred_region
      _
    $region9: #{tpu_custom_call.1} parent=1 // pred_fallthru
      _
    // Predicated region
    $region10: #{tpu_custom_call.1} parent=1 // pred_check
      _
    $region11: #{tpu_custom_call.1} parent=1 // pred_check_branch
      %25 = sbr.rel (0) target = $region13
    $region12: #{tpu_custom_call.1} parent=1 // pred_region
      _
    $region13: #{tpu_custom_call.1} parent=1 // pred_fallthru
      _
    // Predicated region
    $region14: #{tpu_custom_call.1} parent=1 // pred_check
      _
    $region15: #{tpu_custom_call.1} parent=1 // pred_check_branch
      %27 = sbr.rel (0) target = $region17
    $region16: #{tpu_custom_call.1} parent=1 // pred_region
      %28 = dma.done [#allocation3], 256
    $region17: #{tpu_custom_call.1} parent=1 // pred_fallthru
      _
    %v29 = vld [vmem:[#allocation2] sm:$0xff]
    %v30 = vld [vmem:[#allocation2 + $0x8] sm:$0xff]
    %vm31 = vcmask 261120
    %v32 = vsel %vm31, %v29, 0.0
    %33 = vadd.xlane.f32.xlu0 %v32
    %v34 = vpop.xlane.xlu0 %33
    %v35 = vsel %vm31, %v30, 0.0
    %36 = vadd.xlane.f32.xlu0 %v35
    %v37 = vpop.xlane.xlu0 %36
    %v38 = vrcp.pop 32.0
    %v39 = vmul.f32 %v34, %v38
    %v40 = vmul.f32 %v37, %v38
    %v41 = vsub.f32 %v29, %v39
    %v42 = vsub.f32 %v30, %v40
    %v43 = vmul.f32 %v41, %v41
    %v44 = vmul.f32 %v42, %v42
    %v45 = vsel %vm31, %v43, 0.0
    %46 = vadd.xlane.f32.xlu0 %v45
    %v47 = vpop.xlane.xlu0 %46
    %v48 = vsel %vm31, %v44, 0.0
    %49 = vadd.xlane.f32.xlu0 %v48
    %v50 = vpop.xlane.xlu0 %49
    %v51 = vmul.f32 %v47, %v38
    %v52 = vmul.f32 %v50, %v38
    %v53 = vadd.f32 %v51, 1e-06
    %v54 = vadd.f32 %v52, 1e-06
    %v55 = vrsqrt.pop %v53
    %v56 = vrsqrt.pop %v54
    %v57 = vmul.f32 %v41, %v55
    %v58 = vmul.f32 %v42, %v56
    %v59 = vld [vmem:[%s1] sm:$0x1]
    %v61 = vlaneseq
    %v62 = vshrl.u32 %v61, 7
    %v63 = vsub.s32 0, %v62
    %v64 = vrot.slane %v59, %v63
    %v66 = vmul.f32 %v57, %v64
    %v67 = vmul.f32 %v58, %v64
    %v68 = vld [vmem:[%s2] sm:$0x1]
    %v70 = vlaneseq
    %v71 = vshrl.u32 %v70, 7
    %v72 = vsub.s32 0, %v71
    %v73 = vrot.slane %v68, %v72
    %v75 = vadd.f32 %v66, %v73
    %v76 = vadd.f32 %v67, %v73
    %77 = vst.msk [vmem:[#allocation5] sm:$0xff] %vm31, %v75
    %78 = vst.msk [vmem:[#allocation5 + $0x8] sm:$0xff] %vm31, %v76
    // Predicated region
    $region18: #{tpu_custom_call.1} parent=1 // pred_check
      _
    $region19: #{tpu_custom_call.1} parent=1 // pred_check_branch
      %80 = sbr.rel (0) target = $region21
    $region20: #{tpu_custom_call.1} parent=1 // pred_region
      %s82 = ssub.s32 256, 256
      %83 = vsyncadd [#allocation4], %s82
      %s84 = sshll.u32 [#allocation5], 4
      %s85 = int_to_ptr.vmem [resolvable:$true] %s84
      %90 = dma.vmem_to_hbm [thread:$0]  %s85, 256, %s3, [#allocation4], 128, 128, 8
    $region21: #{tpu_custom_call.1} parent=1 // pred_fallthru
      _
    // Predicated region
    $region22: #{tpu_custom_call.1} parent=1 // pred_check
      _
    $region23: #{tpu_custom_call.1} parent=1 // pred_check_branch
      %92 = sbr.rel (0) target = $region25
    $region24: #{tpu_custom_call.1} parent=1 // pred_region
      %93 = dma.done [#allocation4], 256
    $region25: #{tpu_custom_call.1} parent=1 // pred_fallthru
      _
    %94 = vsyncpa [#allocation3], 1
    %95 = vsyncpa [#allocation4], 1

</llo_original>
